<compile_context>
chip_gen: v7x
topology: tpu7x:2x2x1
jax: 0.10.0
libtpu: 0.0.40
codegen_flags: <defaults>
</compile_context>

<pallas_src>
import functools

import jax
import jax.numpy as jnp
from jax.experimental import pallas as pl
from jax.experimental.pallas import tpu as pltpu

MSE_WEIGHT = 1.0
REL_WEIGHT = 0.1
EPSILON = 1e-4

_LANES = 128
_BLOCK_ROWS = 1024                      # (1024, 128) f32 block = 512 KiB / input / step
_NUM_CORE_SPLITS = 2                    # v7x: 2 TensorCores; elsewhere a cheap loop of 2
_SMALL_B_THRESHOLD = _BLOCK_ROWS * _LANES  # <= 128K elements -> gridless path


def _weighted_sq_error(pred, gt, *, mse_weight, rel_weight, epsilon):
    """Per-element mse_w*d^2 + rel_w*(d/(gt+eps))^2, algebraically folded."""
    pred = pred.astype(jnp.float32)
    gt = gt.astype(jnp.float32)
    diff = pred - gt
    d2 = diff * diff
    x = gt + epsilon
    # EUP approx reciprocal + one Newton-Raphson step (~2^-24 rel err) instead of
    # the multi-bundle VALU divide that approx=False lowers to.
    r = pl.reciprocal(x, approx=True)
    r = r * (2.0 - x * r)
    return d2 * (mse_weight + rel_weight * (r * r))


def _small_kernel(pred_ref, gt_ref, out_ref, *, inv_n, mse_weight, rel_weight,
                  epsilon):
    w = _weighted_sq_error(pred_ref[...], gt_ref[...], mse_weight=mse_weight,
                           rel_weight=rel_weight, epsilon=epsilon)
    out_ref[0, 0] = jnp.sum(w) * inv_n


def _tiled_kernel(pred_ref, gt_ref, out_ref, *, inv_n, mse_weight, rel_weight,
                  epsilon):
    i = pl.program_id(1)

    @pl.when(i == 0)
    def _():
        out_ref[...] = jnp.zeros_like(out_ref)

    w = _weighted_sq_error(pred_ref[...], gt_ref[...], mse_weight=mse_weight,
                           rel_weight=rel_weight, epsilon=epsilon)
    out_ref[...] += jnp.sum(w, keepdims=True)

    @pl.when(i == pl.num_programs(1) - 1)
    def _():
        out_ref[...] = out_ref[...] * inv_n


def _pad_to_2d(x, padded_rows):
    """Zero-pad a (B,) vector and reshape to a lane/sublane-dense (R, 128) tile."""
    b = x.shape[0]
    padded_b = padded_rows * _LANES
    if padded_b != b:
        x = jnp.pad(x, (0, padded_b - b))   # zero pad: diff==0 -> contributes 0
    return x.reshape(padded_rows, _LANES)


def combined_loss(pred_count, gt_count, *, mse_weight=MSE_WEIGHT,
                  rel_weight=REL_WEIGHT, epsilon=EPSILON):
    """Equivalent of CombinedLoss(reduction='mean')(pred_count, gt_count)."""
    assert pred_count.shape == gt_count.shape and pred_count.ndim == 1
    b = pred_count.shape[0]
    kw = dict(inv_n=1.0 / float(b), mse_weight=float(mse_weight),
              rel_weight=float(rel_weight), epsilon=float(epsilon))

    if b <= _SMALL_B_THRESHOLD:
        # Gridless single-block path: launch/DMA-latency bound at this size.
        rows = pl.cdiv(b, _LANES)
        out = pl.pallas_call(
            functools.partial(_small_kernel, **kw),
            out_shape=jax.ShapeDtypeStruct((1, 1), jnp.float32),
            in_specs=[pl.BlockSpec(memory_space=pltpu.VMEM),
                      pl.BlockSpec(memory_space=pltpu.VMEM)],
            out_specs=pl.BlockSpec(memory_space=pltpu.SMEM),
        )(_pad_to_2d(pred_count, rows), _pad_to_2d(gt_count, rows))
        return out[0, 0]

    # Large-B path: pipelined reduction grid + per-core partial sums.
    rows = pl.cdiv(b, _LANES)
    rows_per_split = pl.cdiv(rows, _NUM_CORE_SPLITS * _BLOCK_ROWS) * _BLOCK_ROWS
    padded_rows = rows_per_split * _NUM_CORE_SPLITS
    steps = rows_per_split // _BLOCK_ROWS

    in_map = lambda c, i: (c * steps + i, 0)
    out = pl.pallas_call(
        functools.partial(_tiled_kernel, **kw),
        out_shape=jax.ShapeDtypeStruct((_NUM_CORE_SPLITS, 1), jnp.float32),
        grid_spec=pltpu.PrefetchScalarGridSpec(
            num_scalar_prefetch=0,
            grid=(_NUM_CORE_SPLITS, steps),
            in_specs=[pl.BlockSpec((_BLOCK_ROWS, _LANES), in_map),
                      pl.BlockSpec((_BLOCK_ROWS, _LANES), in_map)],
            out_specs=pl.BlockSpec((1, 1), lambda c, i: (c, 0)),
        ),
        compiler_params=pltpu.CompilerParams(
            dimension_semantics=("parallel", "arbitrary")),
    )(_pad_to_2d(pred_count, padded_rows), _pad_to_2d(gt_count, padded_rows))
    # Each core already applied inv_n to its partial; total mean = sum of partials.
    return jnp.sum(out)


def _reference(pred, gt, mse_weight=MSE_WEIGHT, rel_weight=REL_WEIGHT, eps=EPSILON):
    diff = pred - gt
    mse = jnp.mean(diff ** 2)
    rel = jnp.mean((diff / (gt + eps)) ** 2)
    return mse_weight * mse + rel_weight * rel


if __name__ == "__main__":
    key = jax.random.PRNGKey(0)
    k1, k2, k3, k4 = jax.random.split(key, 4)

    # Small-B (batch-size scale) check — gridless path.
    B = 8
    gt_count = jax.random.uniform(k1, (B,), jnp.float32, minval=1.0, maxval=50.0)
    pred_count = gt_count + jax.random.normal(k2, (B,), jnp.float32) * 2.0
    loss = combined_loss(pred_count, gt_count)
    jax.block_until_ready(loss)
    ref = _reference(pred_count, gt_count)
    assert jnp.allclose(loss, ref, rtol=1e-5, atol=1e-6), (loss, ref)

    # Larger-B check exercising the tiled / dual-core reduction path (and padding).
    B2 = 200_000  # not a multiple of 128
    gt2 = jax.random.uniform(k3, (B2,), jnp.float32, minval=0.5, maxval=50.0)
    pred2 = gt2 + jax.random.normal(k4, (B2,), jnp.float32)
    loss2 = combined_loss(pred2, gt2)
    jax.block_until_ready(loss2)
    ref2 = _reference(pred2, gt2)
    assert jnp.allclose(loss2, ref2, rtol=1e-4, atol=1e-6), (loss2, ref2)

    print("KERNEL_OK")
</pallas_src>

<mosaic_0001>
module attributes {stable_mosaic.version = 11 : i64} {
  func.func @_small_kernel(%arg0: memref<1x128xf32, #tpu.memory_space<vmem>>, %arg1: memref<1x128xf32, #tpu.memory_space<vmem>>, %arg2: memref<1x1xf32, #tpu.memory_space<smem>>) attributes {dimension_semantics = [], scalar_prefetch = 0 : i64, scratch_operands = 0 : i64, tpu.core_type = #tpu.core_type<tc>} {
    %c0 = arith.constant 0 : index
    %c0_0 = arith.constant 0 : index
    %0 = vector.load %arg0[%c0, %c0_0] : memref<1x128xf32, #tpu.memory_space<vmem>>, vector<1x128xf32>
    %c0_1 = arith.constant 0 : index
    %c0_2 = arith.constant 0 : index
    %1 = vector.load %arg1[%c0_1, %c0_2] : memref<1x128xf32, #tpu.memory_space<vmem>>, vector<1x128xf32>
    %2 = arith.subf %0, %1 : vector<1x128xf32>
    %3 = arith.mulf %2, %2 : vector<1x128xf32>
    %cst = arith.constant 9.99999974E-5 : f32
    %4 = vector.broadcast %cst : f32 to vector<1x128xf32>
    %5 = arith.addf %1, %4 : vector<1x128xf32>
    %6 = tpu.reciprocal %5 {approx = true} : vector<1x128xf32> -> vector<1x128xf32>
    %7 = arith.mulf %5, %6 : vector<1x128xf32>
    %cst_3 = arith.constant 2.000000e+00 : f32
    %8 = vector.broadcast %cst_3 : f32 to vector<1x128xf32>
    %9 = arith.subf %8, %7 : vector<1x128xf32>
    %10 = arith.mulf %6, %9 : vector<1x128xf32>
    %11 = arith.mulf %10, %10 : vector<1x128xf32>
    %cst_4 = arith.constant 1.000000e-01 : f32
    %12 = vector.broadcast %cst_4 : f32 to vector<1x128xf32>
    %13 = arith.mulf %12, %11 : vector<1x128xf32>
    %cst_5 = arith.constant 1.000000e+00 : f32
    %14 = vector.broadcast %cst_5 : f32 to vector<1x128xf32>
    %15 = arith.addf %14, %13 : vector<1x128xf32>
    %16 = arith.mulf %3, %15 : vector<1x128xf32>
    %17 = vector.shape_cast %16 : vector<1x128xf32> to vector<1x1x128xf32>
    %cst_6 = arith.constant dense<0.000000e+00> : vector<1xf32>
    %18 = vector.multi_reduction <add>, %17, %cst_6 [1, 2] : vector<1x1x128xf32> to vector<1xf32>
    %19 = vector.shape_cast %18 : vector<1xf32> to vector<1x1x1xf32>
    %20 = vector.extract %19[0, 0, 0] : f32 from vector<1x1x1xf32>
    %cst_7 = arith.constant 1.250000e-01 : f32
    %21 = arith.mulf %20, %cst_7 : f32
    %c0_8 = arith.constant 0 : index
    %c0_9 = arith.constant 0 : index
    %22 = memref.load %arg2[%c0_8, %c0_9] : memref<1x1xf32, #tpu.memory_space<smem>>
    memref.store %21, %arg2[%c0_8, %c0_9] : memref<1x1xf32, #tpu.memory_space<smem>>
    return
  }
}

</mosaic_0001>

<llo_original>
// kernel: tpu_custom_call.1
$region0: #{tpu_custom_call.1}
  #allocation0 [shape = 'u32[]', space=smem, size = 0x4, offset = 0x4, fixed_abs, tag = 'smem constant byte address 0x4 - core index']
  #allocation1 [shape = 'u32[144,128]{1,0:T(1,128)}', space=vmem, size = 0x12000, scoped, tag = 'internal scratch']
  %s0 = inlined_call_operand.hbm [shape: f32[1,128], index: 0, kind: input, shape index: {}]
  %s1 = inlined_call_operand.vmem [shape: f32[1,128], index: 1, kind: input, shape index: {}]
  %s2 = inlined_call_operand.hbm [shape: f32[1,1], index: 2, kind: output, shape index: {}]
  %s3 = sld [smem:[#allocation0]]
  $region22: #{tpu_custom_call.1} parent=0
    _
  %s5 = ssub.s32 1, %s3
  %s6 = scalar_select 0, %s5, %s3
  $region1: #{tpu_custom_call.1} parent=0
    #allocation2 [shape = 'u8[512]{0}', space=vmem, size = 0x400, scoped, tag = 'input window, operand 0, single buffered']
    #allocation3 [shape = 's32[1]{0}', space=sflag, size = 0x4, scoped, tag = 'scoped memory for tpu_custom_call.1']
    #allocation4 [shape = 's32[1]{0}', space=sflag, size = 0x4, scoped, tag = 'scoped memory for tpu_custom_call.1']
    #allocation5 [shape = 'u8[512]{0}', space=smem, size = 0x200, scoped, tag = 'output window, operand 0, single buffered']
    %7 = vsyncpa [#allocation3], 0
    %8 = vsyncpa [#allocation4], 0
    // Predicated region
    $region2: #{tpu_custom_call.1} parent=1 // pred_check
      _
    $region3: #{tpu_custom_call.1} parent=1 // pred_check_branch
      %10 = sbr.rel (0) target = $region5
    $region4: #{tpu_custom_call.1} parent=1 // pred_region
      %s12 = ssub.s32 16, 16
      %13 = vsyncadd [#allocation3], %s12
      %s15 = sshll.u32 [#allocation2], 4
      %s16 = int_to_ptr.vmem [resolvable:$true] %s15
      %18 = dma.hbm_to_vmem [thread:$0]  %s0, 16, %s16, [#allocation3]
    $region5: #{tpu_custom_call.1} parent=1 // pred_fallthru
      _
    // Predicated region
    $region6: #{tpu_custom_call.1} parent=1 // pred_check
      _
    $region7: #{tpu_custom_call.1} parent=1 // pred_check_branch
      %20 = sbr.rel (0) target = $region9
    $region8: #{tpu_custom_call.1} parent=1 // pred_region
      _
    $region9: #{tpu_custom_call.1} parent=1 // pred_fallthru
      _
    // Predicated region
    $region10: #{tpu_custom_call.1} parent=1 // pred_check
      _
    $region11: #{tpu_custom_call.1} parent=1 // pred_check_branch
      %22 = sbr.rel (0) target = $region13
    $region12: #{tpu_custom_call.1} parent=1 // pred_region
      %23 = dma.done [#allocation3], 16
    $region13: #{tpu_custom_call.1} parent=1 // pred_fallthru
      _
    %v24 = vld [vmem:[#allocation2] sm:$0x1]
    %v25 = vld [vmem:[%s1] sm:$0x1]
    %v26 = vsub.f32 %v24, %v25
    %v27 = vmul.f32 %v26, %v26
    %v28 = vadd.f32 %v25, 0.0001
    %v29 = vrcp.pop %v28
    %v30 = vmul.f32 %v28, %v29
    %v31 = vsub.f32 2.0, %v30
    %v32 = vmul.f32 %v29, %v31
    %v33 = vmul.f32 %v32, %v32
    %v34 = vmul.f32 %v33, 0.1
    %v35 = vadd.f32 %v34, 1.0
    %v36 = vmul.f32 %v27, %v35
    %vm37 = vcmask 1040384
    %v38 = vsel %vm37, %v36, 0.0
    %39 = vadd.xlane.f32.xlu0 %v38
    %v40 = vpop.xlane.xlu0 %39
    %v41 = vrot.slane %v40, 4
    %v42 = vadd.f32 %v40, %v41
    %v43 = vrot.slane %v42, 2
    %v44 = vadd.f32 %v42, %v43
    %v45 = vrot.slane %v44, 1
    %v46 = vadd.f32 %v44, %v45
    %s47 = vtos %v46
    %s48 = smul.f32 %s47, 0.125
    %s49 = scalar_lea.smem [#allocation5], 0
    %50 = sst [smem:[%s49]] %s48
    // Predicated region
    $region14: #{tpu_custom_call.1} parent=1 // pred_check
      _
    $region15: #{tpu_custom_call.1} parent=1 // pred_check_branch
      %52 = sbr.rel (0) target = $region17
    $region16: #{tpu_custom_call.1} parent=1 // pred_region
      %s54 = ssub.s32 16, 16
      %55 = vsyncadd [#allocation4], %s54
      %58 = dma.smem_to_hbm [#allocation5], 16, %s2, [#allocation4]
    $region17: #{tpu_custom_call.1} parent=1 // pred_fallthru
      _
    // Predicated region
    $region18: #{tpu_custom_call.1} parent=1 // pred_check
      _
    $region19: #{tpu_custom_call.1} parent=1 // pred_check_branch
      %60 = sbr.rel (0) target = $region21
    $region20: #{tpu_custom_call.1} parent=1 // pred_region
      %61 = dma.done [#allocation4], 16
    $region21: #{tpu_custom_call.1} parent=1 // pred_fallthru
      _
    %62 = sfence
    %63 = vsyncpa [#allocation3], 1
    %64 = vsyncpa [#allocation4], 1

</llo_original>
